<compile_context>
chip_gen: v5e
topology: v5e:2x2
jax: 0.10.0
libtpu: 0.0.40
codegen_flags: <defaults>
</compile_context>

<pallas_src>
import functools

import jax
import jax.numpy as jnp
from jax.experimental import pallas as pl
from jax.experimental.pallas import tpu as pltpu

# (cin, cout) per conv, 'M' = 2x2 maxpool.  This is vgg19.features[:36]
# (ends at the ReLU after conv5_4; the 5th maxpool is NOT included).
VGG19_CFG = [
    (3, 64), (64, 64), "M",
    (64, 128), (128, 128), "M",
    (128, 256), (256, 256), (256, 256), (256, 256), "M",
    (256, 512), (512, 512), (512, 512), (512, 512), "M",
    (512, 512), (512, 512), (512, 512), (512, 512),
]

IMAGENET_MEAN = (0.485, 0.456, 0.406)
IMAGENET_STD = (0.229, 0.224, 0.225)

# Layers with Cin at/below this keep the dx taps fused into K (fills the MXU
# K dimension); wider layers run 9 K=Cin matmuls and skip the xcat copy.
_KFUSE_MAX_CIN = 128
# Cout chunk for the grid's output-channel axis (used when Cout >= 512).
_COUT_TILE = 256

_HAS_BUFFERED = hasattr(pl, "Buffered")
_SINGLE_BUFFER_OK = _HAS_BUFFERED  # flips False if this build rejects Buffered(1)


@functools.lru_cache(maxsize=None)
def _vmem_limit_bytes():
    """Generation-aware scoped-VMEM budget with headroom below physical VMEM."""
    try:
        phys = int(pltpu.get_tpu_info().vmem_capacity_bytes)
    except Exception:
        phys = 64 * 1024 * 1024  # conservative (v7x-sized) fallback
    # ~5/8 of physical: 40 MiB on 64 MiB parts (v7x), 80 MiB on 128 MiB parts.
    return max(32 * 1024 * 1024, min(phys * 5 // 8, 80 * 1024 * 1024))


def _conv_step_bytes(TH, W, Cin, cout_tile, *, pool, fuse_k, halo, out_bytes):
    """Approximate per-grid-step VMEM footprint (pipeline buffers + temps)."""
    TH_out, W_out = (TH // 2, W // 2) if pool else (TH, W)
    b = 2 * TH * W * Cin * 2                          # input strip x2 buffers (bf16)
    if halo:
        b += 2 * 2 * W * Cin * 2                      # two 1-row halos x2 buffers
    b += 2 * 9 * Cin * cout_tile * 2                  # weight chunk x2 buffers
    b += 2 * TH_out * W_out * cout_tile * out_bytes   # output block x2 buffers
    strip = (TH + 2) * W * Cin * 2
    tmp = (6 if fuse_k else 3) * strip                # rows, v0, v2 (+ xcat)
    k_mm = 3 * Cin if fuse_k else Cin
    tmp += TH * W * k_mm * 2                          # one lhs working slab
    tmp += 2 * TH * W * cout_tile * 4                 # f32 accumulator + activation
    return b + tmp


def _pick_strip_height(H, *, need_even, th_max, fits):
    """Largest divisor of H (<= th_max if given) whose step fits the VMEM budget."""
    cap = min(H, th_max) if th_max else H
    best = 0
    for d in range(1, cap + 1):
        if H % d or (need_even and d % 2):
            continue
        if fits(d):
            best = d
    if best:
        return best
    for d in range(1, H + 1):  # over-budget fallback: smallest legal strip
        if H % d == 0 and (not need_even or d % 2 == 0):
            return d
    return H


def _const_spec(shape, index_map, single_buffer):
    """BlockSpec for constant-index blocks; single-buffer them when requested."""
    if single_buffer:
        return pl.BlockSpec(shape, index_map, pipeline_mode=pl.Buffered(1))
    return pl.BlockSpec(shape, index_map)


# ---------------------------------------------------------------------------
# fused 3x3 conv (pad=1, stride=1) + bias + ReLU (+ optional 2x2 maxpool)
# ---------------------------------------------------------------------------
def _make_conv_kernel(*, W, Cin, TH, S, cout_tile, pool, fuse_k):
    TH_out = TH // 2 if pool else TH
    W_out = W // 2 if pool else W
    aligned = (W % 8 == 0)  # flattened sublane slices stay (8,128)-tile aligned

    def kernel(cur_ref, prv_ref, nxt_ref, w_ref, b_ref, o_ref):
        s = pl.program_id(2)
        dt = cur_ref.dtype
        zero_row = jnp.zeros((1, W, Cin), dt)

        # ---- assemble the zero-padded (TH+2, W, Cin) row strip -------------
        cur = cur_ref[0]                                       # (TH, W, Cin)
        if S > 1:
            top = jnp.where(s > 0, prv_ref[0], zero_row)       # halo row above
            bot = jnp.where(s < S - 1, nxt_ref[0], zero_row)   # halo row below
        else:
            top, bot = zero_row, zero_row
        rows = jnp.concatenate([top, cur, bot], axis=0)        # (TH+2, W, Cin)

        # ---- W-shifted views (dx = 0 / 1 / 2), computed once ---------------
        if W > 1:
            zero_col = jnp.zeros((TH + 2, 1, Cin), dt)
            v0 = jnp.concatenate([zero_col, rows[:, :W - 1, :]], axis=1)
            v2 = jnp.concatenate([rows[:, 1:, :], zero_col], axis=1)
        else:
            v0 = v2 = jnp.zeros((TH + 2, 1, Cin), dt)

        if fuse_k:
            mats = (jnp.concatenate([v0, rows, v2], axis=-1),)  # (TH+2, W, 3*Cin)
        else:
            mats = (v0, rows, v2)                               # 3 x (TH+2, W, Cin)

        # ---- lhs extraction: aligned slices of a flattened strip if possible
        if aligned:
            flats = [m.reshape((TH + 2) * W, m.shape[-1]) for m in mats]

            def lhs(dy, j):
                return flats[j][dy * W:(dy + TH) * W, :]
        else:
            def lhs(dy, j):
                m = mats[j]
                return m[dy:dy + TH].reshape(TH * W, m.shape[-1])

        # ---- MXU taps, accumulated in a local value (no VMEM scratch) ------
        acc = None
        for dy in range(3):
            for j in range(len(mats)):
                widx = dy if fuse_k else 3 * dy + j
                prod = jnp.dot(lhs(dy, j), w_ref[widx],
                               preferred_element_type=jnp.float32)
                acc = prod if acc is None else acc + prod

        # ---- bias + ReLU (+ fused 2x2 maxpool), single lane-dense store ----
        r = jnp.maximum(acc + b_ref[...], 0.0)                  # (TH*W, ct) f32
        if pool:
            r = r.reshape(TH_out, 2, W_out, 2, cout_tile)
            r = jnp.maximum(jnp.maximum(r[:, 0, :, 0, :], r[:, 0, :, 1, :]),
                            jnp.maximum(r[:, 1, :, 0, :], r[:, 1, :, 1, :]))
            o_ref[0] = r.astype(o_ref.dtype)
        else:
            o_ref[0] = r.reshape(TH, W, cout_tile).astype(o_ref.dtype)

    return kernel


def conv3x3_relu_pool(x, w_k, bias, *, pool, out_dtype, th_max=None):
    """x: (N, H, W, Cin) bf16.  w_k: (3, 3*Cin, Cout) K-fused or (9, Cin, Cout)."""
    global _SINGLE_BUFFER_OK
    N, H, W, Cin = x.shape
    Cout = w_k.shape[-1]
    fuse_k = (w_k.shape[0] == 3)
    if pool:
        assert H % 2 == 0 and W % 2 == 0, "2x2 maxpool needs even H, W"

    cout_tile = _COUT_TILE if Cout >= 512 else Cout
    C = Cout // cout_tile
    out_bytes = jnp.dtype(out_dtype).itemsize
    budget = int(0.75 * _vmem_limit_bytes())
    fits = lambda th: _conv_step_bytes(th, W, Cin, cout_tile, pool=pool,
                                       fuse_k=fuse_k, halo=True,
                                       out_bytes=out_bytes) <= budget
    TH = _pick_strip_height(H, need_even=pool, th_max=th_max, fits=fits)
    S = H // TH
    TH_out = TH // 2 if pool else TH
    W_out = W // 2 if pool else W
    H_out = H // 2 if pool else H

    kernel = _make_conv_kernel(W=W, Cin=Cin, TH=TH, S=S, cout_tile=cout_tile,
                               pool=pool, fuse_k=fuse_k)

    # Halo rows arrive as two extra 1-row blocks with clamped index maps
    # (the clamped/garbage row is replaced by the zero pad row in-kernel).
    prev_map = lambda c, n, s: (n, jnp.maximum(s * TH - 1, 0), 0, 0)
    next_map = lambda c, n, s: (n, jnp.minimum(s * TH + TH, H - 1), 0, 0)

    def run(single_buffer_consts):
        grid_spec = pltpu.PrefetchScalarGridSpec(
            num_scalar_prefetch=0,
            # Cout chunks outermost: each weight chunk is fetched from HBM once.
            grid=(C, N, S),
            in_specs=[
                pl.BlockSpec((1, TH, W, Cin), lambda c, n, s: (n, s, 0, 0)),
                pl.BlockSpec((1, 1, W, Cin), prev_map),
                pl.BlockSpec((1, 1, W, Cin), next_map),
                _const_spec(w_k.shape[:2] + (cout_tile,),
                            lambda c, n, s: (0, 0, c), single_buffer_consts),
                _const_spec((1, cout_tile), lambda c, n, s: (0, c),
                            single_buffer_consts),
            ],
            out_specs=pl.BlockSpec((1, TH_out, W_out, cout_tile),
                                   lambda c, n, s: (n, s, 0, c)),
        )
        return pl.pallas_call(
            kernel,
            out_shape=jax.ShapeDtypeStruct((N, H_out, W_out, Cout), out_dtype),
            grid_spec=grid_spec,
            compiler_params=pltpu.CompilerParams(
                dimension_semantics=("parallel", "parallel", "parallel"),
                vmem_limit_bytes=_vmem_limit_bytes()),
        )(x, x, x, w_k, bias)

    # Single-buffer the weight/bias blocks only when their index maps really
    # are constant (C == 1); auto-fallback if Buffered(1) is unsupported.
    if C == 1 and _SINGLE_BUFFER_OK:
        try:
            return run(True)
        except Exception:
            _SINGLE_BUFFER_OK = False
    return run(False)


# ---------------------------------------------------------------------------
# conv1_1 on a wrapper-packed im2col slab: one dense matmul, no shuffles
# ---------------------------------------------------------------------------
def _make_packed_conv_kernel(*, W, K, Cout, TH, pool):
    TH_out = TH // 2 if pool else TH
    W_out = W // 2 if pool else W

    def kernel(x_ref, w_ref, b_ref, o_ref):
        lhs = x_ref[0].reshape(TH * W, K)
        acc = jnp.dot(lhs, w_ref[...], preferred_element_type=jnp.float32)
        r = jnp.maximum(acc + b_ref[...], 0.0)
        if pool:
            r = r.reshape(TH_out, 2, W_out, 2, Cout)
            r = jnp.maximum(jnp.maximum(r[:, 0, :, 0, :], r[:, 0, :, 1, :]),
                            jnp.maximum(r[:, 1, :, 0, :], r[:, 1, :, 1, :]))
            o_ref[0] = r.astype(o_ref.dtype)
        else:
            o_ref[0] = r.reshape(TH, W, Cout).astype(o_ref.dtype)

    return kernel


def packed_conv_relu_pool(x, w, bias, *, pool, out_dtype, th_max=None):
    """x: (N, H, W, 9*Cin) pre-packed im2col bf16.  w: (9*Cin, Cout)."""
    global _SINGLE_BUFFER_OK
    N, H, W, K = x.shape
    Cout = w.shape[-1]
    if pool:
        assert H % 2 == 0 and W % 2 == 0
    out_bytes = jnp.dtype(out_dtype).itemsize
    budget = int(0.75 * _vmem_limit_bytes())
    fits = lambda th: _conv_step_bytes(th, W, K, Cout, pool=pool, fuse_k=False,
                                       halo=False, out_bytes=out_bytes) <= budget
    TH = _pick_strip_height(H, need_even=pool, th_max=th_max, fits=fits)
    S = H // TH
    TH_out = TH // 2 if pool else TH
    W_out = W // 2 if pool else W
    H_out = H // 2 if pool else H

    kernel = _make_packed_conv_kernel(W=W, K=K, Cout=Cout, TH=TH, pool=pool)

    def run(single_buffer_consts):
        grid_spec = pltpu.PrefetchScalarGridSpec(
            num_scalar_prefetch=0,
            grid=(N, S),
            in_specs=[
                pl.BlockSpec((1, TH, W, K), lambda n, s: (n, s, 0, 0)),
                _const_spec((K, Cout), lambda n, s: (0, 0), single_buffer_consts),
                _const_spec((1, Cout), lambda n, s: (0, 0), single_buffer_consts),
            ],
            out_specs=pl.BlockSpec((1, TH_out, W_out, Cout),
                                   lambda n, s: (n, s, 0, 0)),
        )
        return pl.pallas_call(
            kernel,
            out_shape=jax.ShapeDtypeStruct((N, H_out, W_out, Cout), out_dtype),
            grid_spec=grid_spec,
            compiler_params=pltpu.CompilerParams(
                dimension_semantics=("parallel", "parallel"),
                vmem_limit_bytes=_vmem_limit_bytes()),
        )(x, w, bias)

    if _SINGLE_BUFFER_OK:
        try:
            return run(True)
        except Exception:
            _SINGLE_BUFFER_OK = False
    return run(False)


# ---------------------------------------------------------------------------
# Parameters: deterministic He-normal placeholders + kernel-layout restacking
# ---------------------------------------------------------------------------
def init_params(key):
    """Per conv: (weight OIHW f32, bias f32), PyTorch layout.
    TODO(synk): real IMAGENET1K_V1 weights cannot be loaded in this sandbox."""
    params = []
    for item in VGG19_CFG:
        if item == "M":
            continue
        cin, cout = item
        key, wk, bk = jax.random.split(key, 3)
        w = jax.random.normal(wk, (cout, cin, 3, 3), jnp.float32) \
            * jnp.sqrt(2.0 / (cin * 9))
        b = 0.01 * jax.random.normal(bk, (cout,), jnp.float32)
        params.append((w, b))
    return params


def prepare_params(params, vgg_normalize=True):
    """Restack PyTorch OIHW weights for the kernels.

    conv1_1    -> (27, 64): dense im2col matmul weights; 1/std of the ImageNet
                  normalization folded in (the -mean half is applied once in
                  the wrapper, so the zero conv padding stays exact).
    Cin <= 128 -> (3, 3*Cin, Cout): dx taps fused into K.
    Cin >= 256 -> (9, Cin, Cout): one (Cin, Cout) matrix per tap.
    Biases     -> (1, Cout) float32.
    """
    std = jnp.asarray(IMAGENET_STD, jnp.float32)
    prepped = []
    for li, (w_oihw, b) in enumerate(params):
        cout, cin = w_oihw.shape[:2]
        w = jnp.transpose(w_oihw, (2, 3, 1, 0))          # (ky, kx, cin, cout)
        if li == 0:
            if vgg_normalize:
                w = w / std[None, None, :, None]
            w_k = w.reshape(9 * cin, cout)               # (27, 64)
        elif cin <= _KFUSE_MAX_CIN:
            w_k = w.reshape(3, 3 * cin, cout)
        else:
            w_k = w.reshape(9, cin, cout)
        prepped.append((w_k.astype(jnp.bfloat16),
                        b.reshape(1, cout).astype(jnp.float32)))
    return prepped


def _im2col3x3(x_nhwc):
    """Zero-padded 3x3 im2col: (N, H, W, C) -> (N, H, W, 9*C), tap-major (dy, dx, c)."""
    N, H, W, _ = x_nhwc.shape
    xp = jnp.pad(x_nhwc, ((0, 0), (1, 1), (1, 1), (0, 0)))
    cols = [xp[:, dy:dy + H, dx:dx + W, :] for dy in range(3) for dx in range(3)]
    return jnp.concatenate(cols, axis=-1)


# ---------------------------------------------------------------------------
# Forward pass: VGG19 features[:36] (ends at ReLU after conv5_4)
# ---------------------------------------------------------------------------
def vgg_feature_extractor(x_nchw, kparams, *, vgg_normalize=True, th_max=None):
    """x_nchw: (N, 3, H, W) in [0, 1].  Returns features in NCHW, float32.
    `vgg_normalize` must match the flag used in prepare_params."""
    x = jnp.transpose(x_nchw, (0, 2, 3, 1)).astype(jnp.float32)      # NHWC
    if vgg_normalize:
        x = x - jnp.asarray(IMAGENET_MEAN, jnp.float32).reshape(1, 1, 1, 3)
    n_convs = len(kparams)
    li, i = 0, 0
    while i < len(VGG19_CFG):
        assert VGG19_CFG[i] != "M"
        pool = (i + 1) < len(VGG19_CFG) and VGG19_CFG[i + 1] == "M"
        w_k, bias = kparams[li]
        out_dtype = jnp.float32 if li == n_convs - 1 else jnp.bfloat16
        if li == 0:
            # conv1_1: lane-sparse im2col packed ONCE in XLA, dense matmul kernel.
            x = _im2col3x3(x).astype(jnp.bfloat16)                   # (N, H, W, 27)
            x = packed_conv_relu_pool(x, w_k, bias, pool=pool,
                                      out_dtype=out_dtype, th_max=th_max)
        else:
            x = conv3x3_relu_pool(x, w_k, bias, pool=pool,
                                  out_dtype=out_dtype, th_max=th_max)
        li += 1
        i += 2 if pool else 1
    return jnp.transpose(x, (0, 3, 1, 2))                            # NHWC -> NCHW


if __name__ == "__main__":
    root = jax.random.PRNGKey(0)
    kx, kp = jax.random.split(root)

    # Small deterministic input batch in [0, 1], NCHW like PyTorch.
    x = jax.random.uniform(kx, (2, 3, 16, 16), dtype=jnp.float32)
    params = init_params(kp)
    kparams = prepare_params(params, vgg_normalize=True)

    # th_max=8 forces the multi-strip (halo) code path even at this tiny
    # 16x16 demo size; real-resolution inputs should pass th_max=None so the
    # strip height comes from the per-generation VMEM budget.
    out = vgg_feature_extractor(x, kparams, vgg_normalize=True, th_max=8)
    out = jax.block_until_ready(out)

    # 16x16 input -> 4 maxpools -> 1x1 spatial, 512 channels after conv5_4+ReLU.
    assert out.shape == (2, 512, 1, 1), out.shape
    assert out.dtype == jnp.float32
    assert bool(jnp.all(jnp.isfinite(out)))
    assert bool(jnp.all(out >= 0.0))  # last op is ReLU
    print("KERNEL_OK")
</pallas_src>

<mosaic_0001>
module attributes {stable_mosaic.version = 11 : i64} {
  func.func @kernel(%arg0: i32, %arg1: i32, %arg2: memref<1x8x16x27xbf16, #tpu.memory_space<vmem>>, %arg3: memref<27x64xbf16, #tpu.memory_space<vmem>>, %arg4: memref<1x64xf32, #tpu.memory_space<vmem>>, %arg5: memref<1x8x16x64xbf16, #tpu.memory_space<vmem>>) attributes {dimension_semantics = [#tpu.dimension_semantics<parallel>, #tpu.dimension_semantics<parallel>], iteration_bounds = array<i64: 2, 2>, scalar_prefetch = 0 : i64, scratch_operands = 0 : i64, tpu.core_type = #tpu.core_type<tc>, window_params = [{transform_indices = @transform_0, window_bounds = array<i64: 1, 8, 16, 27>}, {pipeline_mode = #tpu.pipeline_mode<synchronous>, transform_indices = @transform_1, window_bounds = array<i64: 27, 64>}, {pipeline_mode = #tpu.pipeline_mode<synchronous>, transform_indices = @transform_2, window_bounds = array<i64: 1, 64>}, {transform_indices = @transform_3, window_bounds = array<i64: 1, 8, 16, 64>}]} {
    %c0 = arith.constant 0 : index
    %c0_0 = arith.constant 0 : index
    %c0_1 = arith.constant 0 : index
    %c0_2 = arith.constant 0 : index
    %0 = vector.load %arg2[%c0, %c0_0, %c0_1, %c0_2] : memref<1x8x16x27xbf16, #tpu.memory_space<vmem>>, vector<1x8x16x27xbf16>
    %1 = vector.shape_cast %0 : vector<1x8x16x27xbf16> to vector<8x16x27xbf16>
    %2 = vector.shape_cast %1 : vector<8x16x27xbf16> to vector<128x27xbf16>
    %c0_3 = arith.constant 0 : index
    %c0_4 = arith.constant 0 : index
    %3 = vector.load %arg3[%c0_3, %c0_4] : memref<27x64xbf16, #tpu.memory_space<vmem>>, vector<27x64xbf16>
    %cst = arith.constant dense<0.000000e+00> : vector<128x64xf32>
    %4 = tpu.matmul %2, %3, %cst {dimension_numbers = #tpu.dot_dimension_numbers<[1], [0], [0], [1], [0, 0, 1, 1], [], []>} : vector<128x27xbf16>, vector<27x64xbf16>, vector<128x64xf32> -> vector<128x64xf32>
    %c0_5 = arith.constant 0 : index
    %c0_6 = arith.constant 0 : index
    %5 = vector.load %arg4[%c0_5, %c0_6] : memref<1x64xf32, #tpu.memory_space<vmem>>, vector<1x64xf32>
    %6 = vector.broadcast %5 : vector<1x64xf32> to vector<128x64xf32>
    %7 = arith.addf %4, %6 : vector<128x64xf32>
    %cst_7 = arith.constant 0.000000e+00 : f32
    %8 = vector.broadcast %cst_7 : f32 to vector<128x64xf32>
    %9 = arith.maximumf %7, %8 : vector<128x64xf32>
    %10 = vector.shape_cast %9 : vector<128x64xf32> to vector<8x16x64xf32>
    %11 = arith.truncf %10 : vector<8x16x64xf32> to vector<8x16x64xbf16>
    %c0_8 = arith.constant 0 : index
    %c0_9 = arith.constant 0 : index
    %c0_10 = arith.constant 0 : index
    %c0_11 = arith.constant 0 : index
    %12 = vector.load %arg5[%c0_8, %c0_9, %c0_10, %c0_11] : memref<1x8x16x64xbf16, #tpu.memory_space<vmem>>, vector<1x8x16x64xbf16>
    %13 = vector.shape_cast %12 : vector<1x8x16x64xbf16> to vector<8x16x64xbf16>
    %14 = vector.shape_cast %11 : vector<8x16x64xbf16> to vector<1x8x16x64xbf16>
    tpu.vector_store %arg5[%c0_8, %c0_9, %c0_10, %c0_11], %14 {strides = array<i32>} : memref<1x8x16x64xbf16, #tpu.memory_space<vmem>>, vector<1x8x16x64xbf16>,
    return
  }
  func.func @transform_0(%arg0: i32, %arg1: i32) -> (i32, i32, i32, i32) {
    %c0_i32 = arith.constant 0 : i32
    %c0_i32_0 = arith.constant 0 : i32
    %c0_i32_1 = arith.constant 0 : i32
    return %arg0, %arg1, %c0_i32, %c0_i32_0 : i32, i32, i32, i32
  }
  func.func @transform_1(%arg0: i32, %arg1: i32) -> (i32, i32) {
    %c0_i32 = arith.constant 0 : i32
    %c0_i32_0 = arith.constant 0 : i32
    %c0_i32_1 = arith.constant 0 : i32
    return %c0_i32, %c0_i32_0 : i32, i32
  }
  func.func @transform_2(%arg0: i32, %arg1: i32) -> (i32, i32) {
    %c0_i32 = arith.constant 0 : i32
    %c0_i32_0 = arith.constant 0 : i32
    %c0_i32_1 = arith.constant 0 : i32
    return %c0_i32, %c0_i32_0 : i32, i32
  }
  func.func @transform_3(%arg0: i32, %arg1: i32) -> (i32, i32, i32, i32) {
    %c0_i32 = arith.constant 0 : i32
    %c0_i32_0 = arith.constant 0 : i32
    %c0_i32_1 = arith.constant 0 : i32
    return %arg0, %arg1, %c0_i32, %c0_i32_0 : i32, i32, i32, i32
  }
}

module attributes {stable_mosaic.version = 11 : i64} {
  func.func @kernel(%arg0: i32, %arg1: i32, %arg2: memref<1x8x16x27xbf16, #tpu.memory_space<vmem>>, %arg3: memref<27x64xbf16, #tpu.memory_space<vmem>>, %arg4: memref<1x64xf32, #tpu.memory_space<vmem>>, %arg5: memref<1x8x16x64xbf16, #tpu.memory_space<vmem>>) attributes {dimension_semantics = [#tpu.dimension_semantics<parallel>, #tpu.dimension_semantics<parallel>], iteration_bounds = array<i64: 2, 2>, scalar_prefetch = 0 : i64, scratch_operands = 0 : i64, tpu.core_type = #tpu.core_type<tc>, window_params = [{transform_indices = @transform_0, window_bounds = array<i64: 1, 8, 16, 27>}, {pipeline_mode = #tpu.pipeline_mode<synchronous>, transform_indices = @transform_1, window_bounds = array<i64: 27, 64>}, {pipeline_mode = #tpu.pipeline_mode<synchronous>, transform_indices = @transform_2, window_bounds = array<i64: 1, 64>}, {transform_indices = @transform_3, window_bounds = array<i64: 1, 8, 16, 64>}]} {
    %c0 = arith.constant 0 : index
    %c0_0 = arith.constant 0 : index
    %c0_1 = arith.constant 0 : index
    %c0_2 = arith.constant 0 : index
    %0 = vector.load %arg2[%c0, %c0_0, %c0_1, %c0_2] : memref<1x8x16x27xbf16, #tpu.memory_space<vmem>>, vector<1x8x16x27xbf16>
    %1 = vector.shape_cast %0 : vector<1x8x16x27xbf16> to vector<8x16x27xbf16>
    %2 = vector.shape_cast %1 : vector<8x16x27xbf16> to vector<128x27xbf16>
    %c0_3 = arith.constant 0 : index
    %c0_4 = arith.constant 0 : index
    %3 = vector.load %arg3[%c0_3, %c0_4] : memref<27x64xbf16, #tpu.memory_space<vmem>>, vector<27x64xbf16>
    %cst = arith.constant dense<0.000000e+00> : vector<128x64xf32>
    %4 = tpu.matmul %2, %3, %cst {dimension_numbers = #tpu.dot_dimension_numbers<[1], [0], [0], [1], [0, 0, 1, 1], [], []>} : vector<128x27xbf16>, vector<27x64xbf16>, vector<128x64xf32> -> vector<128x64xf32>
    %c0_5 = arith.constant 0 : index
    %c0_6 = arith.constant 0 : index
    %5 = vector.load %arg4[%c0_5, %c0_6] : memref<1x64xf32, #tpu.memory_space<vmem>>, vector<1x64xf32>
    %6 = vector.broadcast %5 : vector<1x64xf32> to vector<128x64xf32>
    %7 = arith.addf %4, %6 : vector<128x64xf32>
    %cst_7 = arith.constant 0.000000e+00 : f32
    %8 = vector.broadcast %cst_7 : f32 to vector<128x64xf32>
    %9 = arith.maximumf %7, %8 : vector<128x64xf32>
    %10 = vector.shape_cast %9 : vector<128x64xf32> to vector<8x16x64xf32>
    %11 = arith.truncf %10 : vector<8x16x64xf32> to vector<8x16x64xbf16>
    %c0_8 = arith.constant 0 : index
    %c0_9 = arith.constant 0 : index
    %c0_10 = arith.constant 0 : index
    %c0_11 = arith.constant 0 : index
    %12 = vector.load %arg5[%c0_8, %c0_9, %c0_10, %c0_11] : memref<1x8x16x64xbf16, #tpu.memory_space<vmem>>, vector<1x8x16x64xbf16>
    %13 = vector.shape_cast %12 : vector<1x8x16x64xbf16> to vector<8x16x64xbf16>
    %14 = vector.shape_cast %11 : vector<8x16x64xbf16> to vector<1x8x16x64xbf16>
    tpu.vector_store %arg5[%c0_8, %c0_9, %c0_10, %c0_11], %14 {strides = array<i32>} : memref<1x8x16x64xbf16, #tpu.memory_space<vmem>>, vector<1x8x16x64xbf16>,
    return
  }
  func.func @transform_0(%arg0: i32, %arg1: i32) -> (i32, i32, i32, i32) {
    %c0_i32 = arith.constant 0 : i32
    %c0_i32_0 = arith.constant 0 : i32
    %c0_i32_1 = arith.constant 0 : i32
    return %arg0, %arg1, %c0_i32, %c0_i32_0 : i32, i32, i32, i32
  }
  func.func @transform_1(%arg0: i32, %arg1: i32) -> (i32, i32) {
    %c0_i32 = arith.constant 0 : i32
    %c0_i32_0 = arith.constant 0 : i32
    %c0_i32_1 = arith.constant 0 : i32
    return %c0_i32, %c0_i32_0 : i32, i32
  }
  func.func @transform_2(%arg0: i32, %arg1: i32) -> (i32, i32) {
    %c0_i32 = arith.constant 0 : i32
    %c0_i32_0 = arith.constant 0 : i32
    %c0_i32_1 = arith.constant 0 : i32
    return %c0_i32, %c0_i32_0 : i32, i32
  }
  func.func @transform_3(%arg0: i32, %arg1: i32) -> (i32, i32, i32, i32) {
    %c0_i32 = arith.constant 0 : i32
    %c0_i32_0 = arith.constant 0 : i32
    %c0_i32_1 = arith.constant 0 : i32
    return %arg0, %arg1, %c0_i32, %c0_i32_0 : i32, i32, i32, i32
  }
}

</mosaic_0001>

<llo_original>
// kernel: tpu_custom_call.1
$region0: #{tpu_custom_call.1}
  #allocation0 [shape = 'u32[]', space=smem, size = 0x4, offset = 0x4, fixed_abs, tag = 'smem constant byte address 0x4 - core index']
  #allocation1 [shape = 'u32[72,128]{1,0:T(1,128)}', space=vmem, size = 0x9000, scoped, tag = 'internal scratch']
  %s0 = inlined_call_operand.hbm [shape: bf16[2,16,16,27], index: 0, kind: input, shape index: {}]
  %s1 = inlined_call_operand.hbm [shape: bf16[27,64], index: 1, kind: input, shape index: {}]
  %s2 = inlined_call_operand.vmem [shape: f32[1,64], index: 2, kind: input, shape index: {}]
  %s3 = inlined_call_operand.hbm [shape: bf16[2,16,16,64], index: 3, kind: output, shape index: {}]
  %s4 = sld [smem:[#allocation0]]
  $region53: #{tpu_custom_call.1} parent=0
    _
  %s6 = ssub.s32 1, %s4
  %s7 = scalar_select 0, %s6, %s4
  $region1: #{tpu_custom_call.1} parent=0
    #allocation2 [shape = 'u8[65536]{0}', space=vmem, size = 0x10000, scoped, tag = 'input window, operand 0']
    #allocation3 [shape = 's32[2]{0}', space=sflag, size = 0x8, scoped, tag = 'scoped memory for tpu_custom_call.1']
    #allocation4 [shape = 's32[2]{0}', space=sflag, size = 0x8, scoped, tag = 'scoped memory for tpu_custom_call.1']
    #allocation5 [shape = 'u8[8192]{0}', space=vmem, size = 0x2000, scoped, tag = 'input window, operand 1, single buffered']
    #allocation6 [shape = 's32[1]{0}', space=sflag, size = 0x4, scoped, tag = 'scoped memory for tpu_custom_call.1']
    #allocation7 [shape = 'u8[65536]{0}', space=vmem, size = 0x10000, scoped, tag = 'output window, operand 0']
    %8 = vsyncpa [#allocation3], 0
    %s9 = scalar_lea.sflag [#allocation3], 1
    %10 = vsyncpa %s9, 0
    %11 = vsyncpa [#allocation6], 0
    %12 = vsyncpa [#allocation4], 0
    %s13 = scalar_lea.sflag [#allocation4], 1
    %14 = vsyncpa %s13, 0
    loop: start=0, step=1, limit=6
    $region2: #{tpu_custom_call.1} parent=1 // loop_pre_header
      _
    $region3: #{tpu_custom_call.1} parent=1 // loop_header
      %s16 = sphi 0, %s20
      %p17 = scmp.ge.s32.totalorder %s16, 6
      %s23 = sphi 0, %s35
      %s24 = sphi 0, %s31
      %s25 = sphi 0, %s23
      %s26 = sphi 0, %s24
      %s27 = sphi 0, %s25
      %s28 = sphi 0, %s26
      %s40 = sphi 0, %s42
      %s43 = sphi 0, %s40
      %s44 = sphi 0, %s43
      %s60 = sphi 0, %s44
      %s64 = sphi 0, %s64
      %s66 = sphi 0, %s64
      %s67 = sphi 0, %s66
      %s81 = sphi 0, %s67
      %s85 = sphi 0, %s85
      %s87 = sphi 0, %s85
      %s88 = sphi 0, %s87
      %s102 = sphi 0, %s88
      %s110 = sphi 0, %s112
      %s113 = sphi 0, %s110
      %s114 = sphi 0, %s113
      %s130 = sphi 0, %s114
    $region4: #{tpu_custom_call.1} parent=1 // loop_header_branch
      %19 = sbr.rel (%p17) target = $region8
    $region5: #{tpu_custom_call.1} parent=1 // loop_body
      %s21 = ssub.s32 %s16, 1
      %s22 = ssub.s32 %s16, 2
      %s29 = sadd.s32 1, %s24
      %p30 = scmp.ge.s32.totalorder %s29, 2
      %s31 = scalar_select %p30, 0, %s29
      %s32 = sadd.s32 1, %s23
      %s33 = scalar_select %p30, %s32, %s23
      %p34 = scmp.ge.s32.totalorder %s33, 2
      %s35 = scalar_select %p34, 0, %s33
      %s36 = ssub.s32 %s23, %s35
      %s37 = ssub.s32 %s24, %s31
      %s38 = sor.u32 %s36, %s37
      %p39 = scmp.eq.s32.totalorder %s38, 0
      %s41 = sadd.s32 %s40, 1
      %s42 = scalar_select %p39, %s40, %s41
      %p45 = pneg %p39
      %p46 = scmp.eq.s32.totalorder %s16, 3
      %p47 = por %p45, %p46
      %p48 = scmp.ne.s32.totalorder %s40, %s43
      %p49 = scmp.eq.s32.totalorder %s16, 0
      %p50 = por %p48, %p49
      %p51 = scmp.ne.s32.totalorder %s40, %s43
      %p52 = scmp.eq.s32.totalorder %s21, 3
      %p53 = por %p51, %p52
      %p54 = scmp.ne.s32.totalorder %s43, %s44
      %p55 = scmp.eq.s32.totalorder %s21, 0
      %p56 = por %p54, %p55
      %p57 = scmp.ne.s32.totalorder %s43, %s44
      %p58 = scmp.eq.s32.totalorder %s22, 3
      %p59 = por %p57, %p58
      %p61 = scmp.ne.s32.totalorder %s44, %s60
      %p62 = scmp.eq.s32.totalorder %s22, 0
      %p63 = por %p61, %p62
      %s65 = sadd.s32 %s64, 1
      %p68 = scmp.eq.s32.totalorder %s16, 3
      %p69 = scmp.ne.s32.totalorder %s64, %s66
      %p70 = scmp.eq.s32.totalorder %s16, 0
      %p71 = por %p69, %p70
      %p72 = scmp.ne.s32.totalorder %s64, %s66
      %p73 = scmp.eq.s32.totalorder %s21, 3
      %p74 = por %p72, %p73
      %p75 = scmp.ne.s32.totalorder %s66, %s67
      %p76 = scmp.eq.s32.totalorder %s21, 0
      %p77 = por %p75, %p76
      %p78 = scmp.ne.s32.totalorder %s66, %s67
      %p79 = scmp.eq.s32.totalorder %s22, 3
      %p80 = por %p78, %p79
      %p82 = scmp.ne.s32.totalorder %s67, %s81
      %p83 = scmp.eq.s32.totalorder %s22, 0
      %p84 = por %p82, %p83
      %s86 = sadd.s32 %s85, 1
      %p89 = scmp.eq.s32.totalorder %s16, 3
      %p90 = scmp.ne.s32.totalorder %s85, %s87
      %p91 = scmp.eq.s32.totalorder %s16, 0
      %p92 = por %p90, %p91
      %p93 = scmp.ne.s32.totalorder %s85, %s87
      %p94 = scmp.eq.s32.totalorder %s21, 3
      %p95 = por %p93, %p94
      %p96 = scmp.ne.s32.totalorder %s87, %s88
      %p97 = scmp.eq.s32.totalorder %s21, 0
      %p98 = por %p96, %p97
      %p99 = scmp.ne.s32.totalorder %s87, %s88
      %p100 = scmp.eq.s32.totalorder %s22, 3
      %p101 = por %p99, %p100
      %p103 = scmp.ne.s32.totalorder %s88, %s102
      %p104 = scmp.eq.s32.totalorder %s22, 0
      %p105 = por %p103, %p104
      %s106 = ssub.s32 %s23, %s35
      %s107 = ssub.s32 %s24, %s31
      %s108 = sor.u32 %s106, %s107
      %p109 = scmp.eq.s32.totalorder %s108, 0
      %s111 = sadd.s32 %s110, 1
      %s112 = scalar_select %p109, %s110, %s111
      %p115 = pneg %p109
      %p116 = scmp.eq.s32.totalorder %s16, 3
      %p117 = por %p115, %p116
      %p118 = scmp.ne.s32.totalorder %s110, %s113
      %p119 = scmp.eq.s32.totalorder %s16, 0
      %p120 = por %p118, %p119
      %p121 = scmp.ne.s32.totalorder %s110, %s113
      %p122 = scmp.eq.s32.totalorder %s21, 3
      %p123 = por %p121, %p122
      %p124 = scmp.ne.s32.totalorder %s113, %s114
      %p125 = scmp.eq.s32.totalorder %s21, 0
      %p126 = por %p124, %p125
      %p127 = scmp.ne.s32.totalorder %s113, %s114
      %p128 = scmp.eq.s32.totalorder %s22, 3
      %p129 = por %p127, %p128
      %p131 = scmp.ne.s32.totalorder %s114, %s130
      %p132 = scmp.eq.s32.totalorder %s22, 0
      %p133 = por %p131, %p132
      %p134 = scmp.le.s32.totalorder 1, %s16
      %p135 = scmp.lt.s32.totalorder %s16, 5
      %p136 = pnand %p134, %p135
      %p137 = pneg %p136
      // Predicated region
      $region9: #{tpu_custom_call.1} parent=5 // pred_check
        _
      $region10: #{tpu_custom_call.1} parent=5 // pred_check_branch
        %139 = sbr.rel (%p136) target = $region12
      $region11: #{tpu_custom_call.1} parent=5 // pred_region
        %s140 = ssub.s32 %s16, 1
        // Predicated region
        $region13: #{tpu_custom_call.1} parent=11 // pred_check
          %p141 = pneg %p77
        $region14: #{tpu_custom_call.1} parent=11 // pred_check_branch
          %143 = sbr.rel (%p141) target = $region16
        $region15: #{tpu_custom_call.1} parent=11 // pred_region
          %145 = vsyncadd [#allocation6], 0
          %s146 = sshll.u32 %s1, 4
          %s147 = int_to_ptr.hbm [resolvable:$true] %s146
          %s148 = sshll.u32 [#allocation5], 4
          %s149 = int_to_ptr.vmem [resolvable:$true] %s148
          %154 = dma.hbm_to_vmem [thread:$0]  %s147, 256, %s149, [#allocation6], 64, 64, 4
        $region16: #{tpu_custom_call.1} parent=11 // pred_fallthru
          _
        // Predicated region
        $region17: #{tpu_custom_call.1} parent=11 // pred_check
          %p155 = pneg %p98
        $region18: #{tpu_custom_call.1} parent=11 // pred_check_branch
          %157 = sbr.rel (%p155) target = $region20
        $region19: #{tpu_custom_call.1} parent=11 // pred_region
          _
        $region20: #{tpu_custom_call.1} parent=11 // pred_fallthru
          _
      $region12: #{tpu_custom_call.1} parent=5 // pred_fallthru
        _
      %p158 = scmp.lt.s32.totalorder %s16, 4
      // Predicated region
      $region21: #{tpu_custom_call.1} parent=5 // pred_check
        %p159 = pneg %p158
      $region22: #{tpu_custom_call.1} parent=5 // pred_check_branch
        %161 = sbr.rel (%p159) target = $region24
      $region23: #{tpu_custom_call.1} parent=5 // pred_region
        // Predicated region
        $region25: #{tpu_custom_call.1} parent=23 // pred_check
          %p162 = pneg %p50
        $region26: #{tpu_custom_call.1} parent=23 // pred_check_branch
          %164 = sbr.rel (%p162) target = $region28
        $region27: #{tpu_custom_call.1} parent=23 // pred_region
          %s165 = sand.u32 %s40, 1
          %s166 = scalar_lea.sflag [#allocation3], %s165
          %s167 = sand.u32 %s40, 1
          %s168 = smul.addr %s167, 64
          %s169 = scalar_lea.vmem [#allocation2], %s168
          %s170 = smul.u32 8, %s24
          %172 = vsyncadd %s166, 0
          %s173 = smul.addr %s170, 2
          %s174 = smul.addr %s23, 32
          %s175 = sadd.s32 %s173, %s174
          %s176 = smul.addr %s175, 4
          %s177 = scalar_lea.hbm %s0, %s176
          %s178 = sshll.u32 %s177, 4
          %s179 = int_to_ptr.hbm [resolvable:$true] %s178
          %s180 = sshll.u32 %s169, 4
          %s181 = int_to_ptr.vmem [resolvable:$true] %s180
          %186 = dma.hbm_to_vmem [thread:$0]  %s179, 1024, %s181, %s166, 64, 64, 4
        $region28: #{tpu_custom_call.1} parent=23 // pred_fallthru
          _
      $region24: #{tpu_custom_call.1} parent=5 // pred_fallthru
        _
      %p187 = scmp.le.s32.totalorder 1, %s16
      %p188 = scmp.lt.s32.totalorder %s16, 5
      %p189 = pnand %p187, %p188
      %p190 = pneg %p189
      // Predicated region
      $region29: #{tpu_custom_call.1} parent=5 // pred_check
        _
      $region30: #{tpu_custom_call.1} parent=5 // pred_check_branch
        %192 = sbr.rel (%p189) target = $region32
      $region31: #{tpu_custom_call.1} parent=5 // pred_region
        %s193 = ssub.s32 %s16, 1
        %s194 = sand.u32 %s43, 1
        %s195 = scalar_lea.sflag [#allocation3], %s194
        %s196 = sand.u32 %s43, 1
        %s197 = smul.addr %s196, 64
        %s198 = scalar_lea.vmem [#allocation2], %s197
        // Predicated region
        $region33: #{tpu_custom_call.1} parent=31 // pred_check
          %p199 = pneg %p56
        $region34: #{tpu_custom_call.1} parent=31 // pred_check_branch
          %201 = sbr.rel (%p199) target = $region36
        $region35: #{tpu_custom_call.1} parent=31 // pred_region
          %203 = dma.done %s195, 1024
        $region36: #{tpu_custom_call.1} parent=31 // pred_fallthru
          _
        // Predicated region
        $region37: #{tpu_custom_call.1} parent=31 // pred_check
          %p204 = pneg %p77
        $region38: #{tpu_custom_call.1} parent=31 // pred_check_branch
          %206 = sbr.rel (%p204) target = $region40
        $region39: #{tpu_custom_call.1} parent=31 // pred_region
          %208 = dma.done [#allocation6], 256
        $region40: #{tpu_custom_call.1} parent=31 // pred_fallthru
          _
        %s209 = sand.u32 %s43, 1
        %s210 = scalar_lea.sflag [#allocation3], %s209
        %s211 = sand.u32 %s43, 1
        %s212 = smul.addr %s211, 64
        %s213 = scalar_lea.vmem [#allocation2], %s212
        %p214 = pneg %p56
        %p215 = pneg %p53
        %p216 = pneg %p77
        %p217 = pneg %p74
        %p218 = pneg %p98
        %p219 = pneg %p95
        %p220 = pneg %p126
        %p221 = pneg %p123
        %s222 = sand.u32 %s113, 1
        %s223 = scalar_lea.sflag [#allocation4], %s222
        %s224 = sand.u32 %s113, 1
        %s225 = smul.addr %s224, 64
        %s226 = scalar_lea.vmem [#allocation7], %s225
        %s227 = smul.u32 8, %s26
        %s228 = smul.u32 8, %s26
        %v230 = vld [vmem:[%s198] sm:$0xf]
        %v231 = vld [vmem:[%s198 + $0x4] sm:$0xf]
        %v232 = vld [vmem:[%s198 + $0x8] sm:$0xf]
        %v233 = vld [vmem:[%s198 + $0xc] sm:$0xf]
        %v234 = vld [vmem:[%s198 + $0x10] sm:$0xf]
        %v235 = vld [vmem:[%s198 + $0x14] sm:$0xf]
        %v236 = vld [vmem:[%s198 + $0x18] sm:$0xf]
        %v237 = vld [vmem:[%s198 + $0x1c] sm:$0xf]
        %v238 = vld [vmem:[%s198 + $0x20] sm:$0xf]
        %v239 = vld [vmem:[%s198 + $0x24] sm:$0xf]
        %v240 = vld [vmem:[%s198 + $0x28] sm:$0xf]
        %v241 = vld [vmem:[%s198 + $0x2c] sm:$0xf]
        %v242 = vld [vmem:[%s198 + $0x30] sm:$0xf]
        %v243 = vld [vmem:[%s198 + $0x34] sm:$0xf]
        %v244 = vld [vmem:[%s198 + $0x38] sm:$0xf]
        %v245 = vld [vmem:[%s198 + $0x3c] sm:$0xf]
        %v246 = vld [vmem:[#allocation5] sm:$0xf]
        %v247 = vld [vmem:[#allocation5 + $0x4] sm:$0xf]
        %v248 = vld [vmem:[#allocation5 + $0x8] sm:$0xf]
        %v249 = vld [vmem:[#allocation5 + $0xc] sm:$0x3]
        %v250 = vld [vmem:[%s2] sm:$0x1]
        %v252 = vperm.slane %v250, 0
        %v270 = vunpack.c.l.b16 %v230
        %v271 = vunpack.c.l.b16 %v231
        %v272 = vunpack.c.l.b16 %v232
        %v273 = vunpack.c.l.b16 %v233
        %v274 = vunpack.c.l.b16 %v234
        %v275 = vunpack.c.l.b16 %v235
        %v276 = vunpack.c.l.b16 %v236
        %v277 = vunpack.c.l.b16 %v237
        %v278 = vunpack.c.l.b16 %v238
        %v279 = vunpack.c.l.b16 %v239
        %v280 = vunpack.c.l.b16 %v240
        %v281 = vunpack.c.l.b16 %v241
        %v282 = vunpack.c.l.b16 %v242
        %v283 = vunpack.c.l.b16 %v243
        %v284 = vunpack.c.l.b16 %v244
        %v285 = vunpack.c.l.b16 %v245
        %v286 = vpack.c.b16 %v271, %v270
        %v287 = vpack.c.b16 %v273, %v272
        %v288 = vpack.c.b16 %v275, %v274
        %v289 = vpack.c.b16 %v277, %v276
        %v290 = vpack.c.b16 %v279, %v278
        %v291 = vpack.c.b16 %v281, %v280
        %v292 = vpack.c.b16 %v283, %v282
        %v293 = vpack.c.b16 %v285, %v284
        %v298 = vunpack.c.l.b16 %v246
        %v299 = vunpack.c.l.b16 %v247
        %v300 = vunpack.c.l.b16 %v248
        %v301 = vunpack.c.l.b16 %v249
        %v302 = vpack.c.b16 %v299, %v298
        %v303 = vpack.c.b16 %v301, %v300
        %vm305 = vcmask 220160
        %v307 = vsel %vm305, %v286, 0
        %v310 = vsel %vm305, %v287, 0
        %v313 = vsel %vm305, %v288, 0
        %v316 = vsel %vm305, %v289, 0
        %v319 = vsel %vm305, %v290, 0
        %v322 = vsel %vm305, %v291, 0
        %v325 = vsel %vm305, %v292, 0
        %v328 = vsel %vm305, %v293, 0
        %vm330 = vcmask 1044480
        %vm331 = vcmask 1045504
        %v332 = vsel %vm330, 4294967295, 65535
        %v333 = vsel %vm331, %v332, 0
        %v335 = vand.u32 %v303, %v333
        %337 = vmatpush.bf16.msra.mxu0 0
        %338 = vmatpush.bf16.msra.mxu0 0
        %339 = vmatpush.bf16.msra.mxu0 0
        %340 = vmatpush.bf16.msra.mxu0 0
        %341 = vmatpush.bf16.msra.mxu0 0
        %342 = vmatpush.bf16.msra.mxu0 0
        %343 = vmatpush.bf16.msra.mxu0 %v335
        %344 = vmatpush.bf16.msra.mxu0 %v302
        %345 = vmatmul.bf16.gmra.mxu0 %v307
        %v346 = vpop.f32.mrf.mxu0
        %v347 = vadd.f32 %v252, %v346
        %v348 = vpop.f32.mrf.mxu0
        %v349 = vadd.f32 %v252, %v348
        %350 = vmatmul.bf16.gmra.mxu0 %v310
        %v351 = vpop.f32.mrf.mxu0
        %v352 = vadd.f32 %v252, %v351
        %v353 = vpop.f32.mrf.mxu0
        %v354 = vadd.f32 %v252, %v353
        %355 = vmatmul.bf16.gmra.mxu0 %v313
        %v356 = vpop.f32.mrf.mxu0
        %v357 = vadd.f32 %v252, %v356
        %v358 = vpop.f32.mrf.mxu0
        %v359 = vadd.f32 %v252, %v358
        %360 = vmatmul.bf16.gmra.mxu0 %v316
        %v361 = vpop.f32.mrf.mxu0
        %v362 = vadd.f32 %v252, %v361
        %v363 = vpop.f32.mrf.mxu0
        %v364 = vadd.f32 %v252, %v363
        %365 = vmatmul.bf16.gmra.mxu0 %v319
        %v366 = vpop.f32.mrf.mxu0
        %v367 = vadd.f32 %v252, %v366
        %v368 = vpop.f32.mrf.mxu0
        %v369 = vadd.f32 %v252, %v368
        %370 = vmatmul.bf16.gmra.mxu0 %v322
        %v371 = vpop.f32.mrf.mxu0
        %v372 = vadd.f32 %v252, %v371
        %v373 = vpop.f32.mrf.mxu0
        %v374 = vadd.f32 %v252, %v373
        %375 = vmatmul.bf16.gmra.mxu0 %v325
        %v376 = vpop.f32.mrf.mxu0
        %v377 = vadd.f32 %v252, %v376
        %v378 = vpop.f32.mrf.mxu0
        %v379 = vadd.f32 %v252, %v378
        %380 = vmatmul.bf16.gmra.mxu0 %v328
        %v381 = vpop.f32.mrf.mxu0
        %v382 = vadd.f32 %v252, %v381
        %v383 = vpop.f32.mrf.mxu0
        %v384 = vadd.f32 %v252, %v383
        %385 = vdwg.mxu0
        %v386 = vmax.f32 %v347, 0.0
        %v387 = vmax.f32 %v349, 0.0
        %v388 = vmax.f32 %v352, 0.0
        %v389 = vmax.f32 %v354, 0.0
        %v390 = vmax.f32 %v357, 0.0
        %v391 = vmax.f32 %v359, 0.0
        %v392 = vmax.f32 %v362, 0.0
        %v393 = vmax.f32 %v364, 0.0
        %v394 = vmax.f32 %v367, 0.0
        %v395 = vmax.f32 %v369, 0.0
        %v396 = vmax.f32 %v372, 0.0
        %v397 = vmax.f32 %v374, 0.0
        %v398 = vmax.f32 %v377, 0.0
        %v399 = vmax.f32 %v379, 0.0
        %v400 = vmax.f32 %v382, 0.0
        %v401 = vmax.f32 %v384, 0.0
        %v402 = vpack.c.bf16 %v386, %v386
        %v403 = vpack.c.bf16 %v387, %v387
        %v404 = vpack.c.bf16 %v388, %v388
        %v405 = vpack.c.bf16 %v389, %v389
        %v406 = vpack.c.bf16 %v390, %v390
        %v407 = vpack.c.bf16 %v391, %v391
        %v408 = vpack.c.bf16 %v392, %v392
        %v409 = vpack.c.bf16 %v393, %v393
        %v410 = vpack.c.bf16 %v394, %v394
        %v411 = vpack.c.bf16 %v395, %v395
        %v412 = vpack.c.bf16 %v396, %v396
        %v413 = vpack.c.bf16 %v397, %v397
        %v414 = vpack.c.bf16 %v398, %v398
        %v415 = vpack.c.bf16 %v399, %v399
        %v416 = vpack.c.bf16 %v400, %v400
        %v417 = vpack.c.bf16 %v401, %v401
        %vm418 = vcmask 519168
        %419 = vst.msk [vmem:[%s226] sm:$0xf] %vm418, %v402
        %420 = vst.msk [vmem:[%s226 + $0x4] sm:$0xf] %vm418, %v403
        %421 = vst.msk [vmem:[%s226 + $0x8] sm:$0xf] %vm418, %v404
        %422 = vst.msk [vmem:[%s226 + $0xc] sm:$0xf] %vm418, %v405
        %423 = vst.msk [vmem:[%s226 + $0x10] sm:$0xf] %vm418, %v406
        %424 = vst.msk [vmem:[%s226 + $0x14] sm:$0xf] %vm418, %v407
        %425 = vst.msk [vmem:[%s226 + $0x18] sm:$0xf] %vm418, %v408
        %426 = vst.msk [vmem:[%s226 + $0x1c] sm:$0xf] %vm418, %v409
        %427 = vst.msk [vmem:[%s226 + $0x20] sm:$0xf] %vm418, %v410
        %428 = vst.msk [vmem:[%s226 + $0x24] sm:$0xf] %vm418, %v411
        %429 = vst.msk [vmem:[%s226 + $0x28] sm:$0xf] %vm418, %v412
        %430 = vst.msk [vmem:[%s226 + $0x2c] sm:$0xf] %vm418, %v413
        %431 = vst.msk [vmem:[%s226 + $0x30] sm:$0xf] %vm418, %v414
        %432 = vst.msk [vmem:[%s226 + $0x34] sm:$0xf] %vm418, %v415
        %433 = vst.msk [vmem:[%s226 + $0x38] sm:$0xf] %vm418, %v416
        %434 = vst.msk [vmem:[%s226 + $0x3c] sm:$0xf] %vm418, %v417
        %s435 = sand.u32 %s113, 1
        %s436 = scalar_lea.sflag [#allocation4], %s435
        %s437 = sand.u32 %s113, 1
        %s438 = smul.addr %s437, 64
        %s439 = scalar_lea.vmem [#allocation7], %s438
        // Predicated region
        $region41: #{tpu_custom_call.1} parent=31 // pred_check
          %p440 = pneg %p123
        $region42: #{tpu_custom_call.1} parent=31 // pred_check_branch
          %442 = sbr.rel (%p440) target = $region44
        $region43: #{tpu_custom_call.1} parent=31 // pred_region
          %s443 = smul.u32 8, %s26
          %445 = vsyncadd %s436, 0
          %s446 = smul.addr %s443, 2
          %s447 = smul.addr %s25, 32
          %s448 = sadd.s32 %s446, %s447
          %s449 = smul.addr %s448, 4
          %s450 = scalar_lea.hbm %s3, %s449
          %s451 = sshll.u32 %s439, 4
          %s452 = int_to_ptr.vmem [resolvable:$true] %s451
          %s453 = sshll.u32 %s450, 4
          %s454 = int_to_ptr.hbm [resolvable:$true] %s453
          %459 = dma.vmem_to_hbm [thread:$0]  %s452, 1024, %s454, %s436, 64, 64, 4
        $region44: #{tpu_custom_call.1} parent=31 // pred_fallthru
          _
      $region32: #{tpu_custom_call.1} parent=5 // pred_fallthru
        _
      %p460 = scmp.le.s32.totalorder 2, %s16
      // Predicated region
      $region45: #{tpu_custom_call.1} parent=5 // pred_check
        %p461 = pneg %p460
      $region46: #{tpu_custom_call.1} parent=5 // pred_check_branch
        %463 = sbr.rel (%p461) target = $region48
      $region47: #{tpu_custom_call.1} parent=5 // pred_region
        %s464 = ssub.s32 %s16, 2
        // Predicated region
        $region49: #{tpu_custom_call.1} parent=47 // pred_check
          %p465 = pneg %p129
        $region50: #{tpu_custom_call.1} parent=47 // pred_check_branch
          %467 = sbr.rel (%p465) target = $region52
        $region51: #{tpu_custom_call.1} parent=47 // pred_region
          %s468 = sand.u32 %s114, 1
          %s469 = scalar_lea.sflag [#allocation4], %s468
          %s470 = sand.u32 %s114, 1
          %s471 = smul.addr %s470, 64
          %s472 = scalar_lea.vmem [#allocation7], %s471
          %474 = dma.done %s469, 1024
        $region52: #{tpu_custom_call.1} parent=47 // pred_fallthru
          _
      $region48: #{tpu_custom_call.1} parent=5 // pred_fallthru
        _
    $region6: #{tpu_custom_call.1} parent=1 // loop_footer
      %s20 = sadd.s32 1, %s16
    $region7: #{tpu_custom_call.1} parent=1 // loop_footer_branch
      %15 = sbr.rel target = $region3
    $region8: #{tpu_custom_call.1} parent=1 // loop_exit
      _
    %475 = vsyncpa [#allocation3], 1
    %s476 = scalar_lea.sflag [#allocation3], 1
    %477 = vsyncpa %s476, 1
    %478 = vsyncpa [#allocation6], 1
    %479 = vsyncpa [#allocation4], 1
    %s480 = scalar_lea.sflag [#allocation4], 1
    %481 = vsyncpa %s480, 1

// kernel: tpu_custom_call.1
$region0: #{tpu_custom_call.1}
  #allocation0 [shape = 'u32[]', space=smem, size = 0x4, offset = 0x4, fixed_abs, tag = 'smem constant byte address 0x4 - core index']
  #allocation1 [shape = 'u32[72,128]{1,0:T(1,128)}', space=vmem, size = 0x9000, scoped, tag = 'internal scratch']
  %s0 = inlined_call_operand.hbm [shape: bf16[2,16,16,27], index: 0, kind: input, shape index: {}]
  %s1 = inlined_call_operand.hbm [shape: bf16[27,64], index: 1, kind: input, shape index: {}]
  %s2 = inlined_call_operand.vmem [shape: f32[1,64], index: 2, kind: input, shape index: {}]
  %s3 = inlined_call_operand.hbm [shape: bf16[2,16,16,64], index: 3, kind: output, shape index: {}]
  %s4 = sld [smem:[#allocation0]]
  $region53: #{tpu_custom_call.1} parent=0
    _
  %s6 = ssub.s32 1, %s4
  %s7 = scalar_select 0, %s6, %s4
  $region1: #{tpu_custom_call.1} parent=0
    #allocation2 [shape = 'u8[65536]{0}', space=vmem, size = 0x10000, scoped, tag = 'input window, operand 0']
    #allocation3 [shape = 's32[2]{0}', space=sflag, size = 0x8, scoped, tag = 'scoped memory for tpu_custom_call.1']
    #allocation4 [shape = 's32[2]{0}', space=sflag, size = 0x8, scoped, tag = 'scoped memory for tpu_custom_call.1']
    #allocation5 [shape = 'u8[8192]{0}', space=vmem, size = 0x2000, scoped, tag = 'input window, operand 1, single buffered']
    #allocation6 [shape = 's32[1]{0}', space=sflag, size = 0x4, scoped, tag = 'scoped memory for tpu_custom_call.1']
    #allocation7 [shape = 'u8[65536]{0}', space=vmem, size = 0x10000, scoped, tag = 'output window, operand 0']
    %8 = vsyncpa [#allocation3], 0
    %s9 = scalar_lea.sflag [#allocation3], 1
    %10 = vsyncpa %s9, 0
    %11 = vsyncpa [#allocation6], 0
    %12 = vsyncpa [#allocation4], 0
    %s13 = scalar_lea.sflag [#allocation4], 1
    %14 = vsyncpa %s13, 0
    loop: start=0, step=1, limit=6
    $region2: #{tpu_custom_call.1} parent=1 // loop_pre_header
      _
    $region3: #{tpu_custom_call.1} parent=1 // loop_header
      %s16 = sphi 0, %s20
      %p17 = scmp.ge.s32.totalorder %s16, 6
      %s23 = sphi 0, %s35
      %s24 = sphi 0, %s31
      %s25 = sphi 0, %s23
      %s26 = sphi 0, %s24
      %s27 = sphi 0, %s25
      %s28 = sphi 0, %s26
      %s40 = sphi 0, %s42
      %s43 = sphi 0, %s40
      %s44 = sphi 0, %s43
      %s60 = sphi 0, %s44
      %s64 = sphi 0, %s64
      %s66 = sphi 0, %s64
      %s67 = sphi 0, %s66
      %s81 = sphi 0, %s67
      %s85 = sphi 0, %s85
      %s87 = sphi 0, %s85
      %s88 = sphi 0, %s87
      %s102 = sphi 0, %s88
      %s110 = sphi 0, %s112
      %s113 = sphi 0, %s110
      %s114 = sphi 0, %s113
      %s130 = sphi 0, %s114
    $region4: #{tpu_custom_call.1} parent=1 // loop_header_branch
      %19 = sbr.rel (%p17) target = $region8
    $region5: #{tpu_custom_call.1} parent=1 // loop_body
      %s21 = ssub.s32 %s16, 1
      %s22 = ssub.s32 %s16, 2
      %s29 = sadd.s32 1, %s24
      %p30 = scmp.ge.s32.totalorder %s29, 2
      %s31 = scalar_select %p30, 0, %s29
      %s32 = sadd.s32 1, %s23
      %s33 = scalar_select %p30, %s32, %s23
      %p34 = scmp.ge.s32.totalorder %s33, 2
      %s35 = scalar_select %p34, 0, %s33
      %s36 = ssub.s32 %s23, %s35
      %s37 = ssub.s32 %s24, %s31
      %s38 = sor.u32 %s36, %s37
      %p39 = scmp.eq.s32.totalorder %s38, 0
      %s41 = sadd.s32 %s40, 1
      %s42 = scalar_select %p39, %s40, %s41
      %p45 = pneg %p39
      %p46 = scmp.eq.s32.totalorder %s16, 3
      %p47 = por %p45, %p46
      %p48 = scmp.ne.s32.totalorder %s40, %s43
      %p49 = scmp.eq.s32.totalorder %s16, 0
      %p50 = por %p48, %p49
      %p51 = scmp.ne.s32.totalorder %s40, %s43
      %p52 = scmp.eq.s32.totalorder %s21, 3
      %p53 = por %p51, %p52
      %p54 = scmp.ne.s32.totalorder %s43, %s44
      %p55 = scmp.eq.s32.totalorder %s21, 0
      %p56 = por %p54, %p55
      %p57 = scmp.ne.s32.totalorder %s43, %s44
      %p58 = scmp.eq.s32.totalorder %s22, 3
      %p59 = por %p57, %p58
      %p61 = scmp.ne.s32.totalorder %s44, %s60
      %p62 = scmp.eq.s32.totalorder %s22, 0
      %p63 = por %p61, %p62
      %s65 = sadd.s32 %s64, 1
      %p68 = scmp.eq.s32.totalorder %s16, 3
      %p69 = scmp.ne.s32.totalorder %s64, %s66
      %p70 = scmp.eq.s32.totalorder %s16, 0
      %p71 = por %p69, %p70
      %p72 = scmp.ne.s32.totalorder %s64, %s66
      %p73 = scmp.eq.s32.totalorder %s21, 3
      %p74 = por %p72, %p73
      %p75 = scmp.ne.s32.totalorder %s66, %s67
      %p76 = scmp.eq.s32.totalorder %s21, 0
      %p77 = por %p75, %p76
      %p78 = scmp.ne.s32.totalorder %s66, %s67
      %p79 = scmp.eq.s32.totalorder %s22, 3
      %p80 = por %p78, %p79
      %p82 = scmp.ne.s32.totalorder %s67, %s81
      %p83 = scmp.eq.s32.totalorder %s22, 0
      %p84 = por %p82, %p83
      %s86 = sadd.s32 %s85, 1
      %p89 = scmp.eq.s32.totalorder %s16, 3
      %p90 = scmp.ne.s32.totalorder %s85, %s87
      %p91 = scmp.eq.s32.totalorder %s16, 0
      %p92 = por %p90, %p91
      %p93 = scmp.ne.s32.totalorder %s85, %s87
      %p94 = scmp.eq.s32.totalorder %s21, 3
      %p95 = por %p93, %p94
      %p96 = scmp.ne.s32.totalorder %s87, %s88
      %p97 = scmp.eq.s32.totalorder %s21, 0
      %p98 = por %p96, %p97
      %p99 = scmp.ne.s32.totalorder %s87, %s88
      %p100 = scmp.eq.s32.totalorder %s22, 3
      %p101 = por %p99, %p100
      %p103 = scmp.ne.s32.totalorder %s88, %s102
      %p104 = scmp.eq.s32.totalorder %s22, 0
      %p105 = por %p103, %p104
      %s106 = ssub.s32 %s23, %s35
      %s107 = ssub.s32 %s24, %s31
      %s108 = sor.u32 %s106, %s107
      %p109 = scmp.eq.s32.totalorder %s108, 0
      %s111 = sadd.s32 %s110, 1
      %s112 = scalar_select %p109, %s110, %s111
      %p115 = pneg %p109
      %p116 = scmp.eq.s32.totalorder %s16, 3
      %p117 = por %p115, %p116
      %p118 = scmp.ne.s32.totalorder %s110, %s113
      %p119 = scmp.eq.s32.totalorder %s16, 0
      %p120 = por %p118, %p119
      %p121 = scmp.ne.s32.totalorder %s110, %s113
      %p122 = scmp.eq.s32.totalorder %s21, 3
      %p123 = por %p121, %p122
      %p124 = scmp.ne.s32.totalorder %s113, %s114
      %p125 = scmp.eq.s32.totalorder %s21, 0
      %p126 = por %p124, %p125
      %p127 = scmp.ne.s32.totalorder %s113, %s114
      %p128 = scmp.eq.s32.totalorder %s22, 3
      %p129 = por %p127, %p128
      %p131 = scmp.ne.s32.totalorder %s114, %s130
      %p132 = scmp.eq.s32.totalorder %s22, 0
      %p133 = por %p131, %p132
      %p134 = scmp.le.s32.totalorder 1, %s16
      %p135 = scmp.lt.s32.totalorder %s16, 5
      %p136 = pnand %p134, %p135
      %p137 = pneg %p136
      // Predicated region
      $region9: #{tpu_custom_call.1} parent=5 // pred_check
        _
      $region10: #{tpu_custom_call.1} parent=5 // pred_check_branch
        %139 = sbr.rel (%p136) target = $region12
      $region11: #{tpu_custom_call.1} parent=5 // pred_region
        %s140 = ssub.s32 %s16, 1
        // Predicated region
        $region13: #{tpu_custom_call.1} parent=11 // pred_check
          %p141 = pneg %p77
        $region14: #{tpu_custom_call.1} parent=11 // pred_check_branch
          %143 = sbr.rel (%p141) target = $region16
        $region15: #{tpu_custom_call.1} parent=11 // pred_region
          %145 = vsyncadd [#allocation6], 0
          %s146 = sshll.u32 %s1, 4
          %s147 = int_to_ptr.hbm [resolvable:$true] %s146
          %s148 = sshll.u32 [#allocation5], 4
          %s149 = int_to_ptr.vmem [resolvable:$true] %s148
          %154 = dma.hbm_to_vmem [thread:$0]  %s147, 256, %s149, [#allocation6], 64, 64, 4
        $region16: #{tpu_custom_call.1} parent=11 // pred_fallthru
          _
        // Predicated region
        $region17: #{tpu_custom_call.1} parent=11 // pred_check
          %p155 = pneg %p98
        $region18: #{tpu_custom_call.1} parent=11 // pred_check_branch
          %157 = sbr.rel (%p155) target = $region20
        $region19: #{tpu_custom_call.1} parent=11 // pred_region
          _
        $region20: #{tpu_custom_call.1} parent=11 // pred_fallthru
          _
      $region12: #{tpu_custom_call.1} parent=5 // pred_fallthru
        _
      %p158 = scmp.lt.s32.totalorder %s16, 4
      // Predicated region
      $region21: #{tpu_custom_call.1} parent=5 // pred_check
        %p159 = pneg %p158
      $region22: #{tpu_custom_call.1} parent=5 // pred_check_branch
        %161 = sbr.rel (%p159) target = $region24
      $region23: #{tpu_custom_call.1} parent=5 // pred_region
        // Predicated region
        $region25: #{tpu_custom_call.1} parent=23 // pred_check
          %p162 = pneg %p50
        $region26: #{tpu_custom_call.1} parent=23 // pred_check_branch
          %164 = sbr.rel (%p162) target = $region28
        $region27: #{tpu_custom_call.1} parent=23 // pred_region
          %s165 = sand.u32 %s40, 1
          %s166 = scalar_lea.sflag [#allocation3], %s165
          %s167 = sand.u32 %s40, 1
          %s168 = smul.addr %s167, 64
          %s169 = scalar_lea.vmem [#allocation2], %s168
          %s170 = smul.u32 8, %s24
          %172 = vsyncadd %s166, 0
          %s173 = smul.addr %s170, 2
          %s174 = smul.addr %s23, 32
          %s175 = sadd.s32 %s173, %s174
          %s176 = smul.addr %s175, 4
          %s177 = scalar_lea.hbm %s0, %s176
          %s178 = sshll.u32 %s177, 4
          %s179 = int_to_ptr.hbm [resolvable:$true] %s178
          %s180 = sshll.u32 %s169, 4
          %s181 = int_to_ptr.vmem [resolvable:$true] %s180
          %186 = dma.hbm_to_vmem [thread:$0]  %s179, 1024, %s181, %s166, 64, 64, 4
        $region28: #{tpu_custom_call.1} parent=23 // pred_fallthru
          _
      $region24: #{tpu_custom_call.1} parent=5 // pred_fallthru
        _
      %p187 = scmp.le.s32.totalorder 1, %s16
      %p188 = scmp.lt.s32.totalorder %s16, 5
      %p189 = pnand %p187, %p188
      %p190 = pneg %p189
      // Predicated region
      $region29: #{tpu_custom_call.1} parent=5 // pred_check
        _
      $region30: #{tpu_custom_call.1} parent=5 // pred_check_branch
        %192 = sbr.rel (%p189) target = $region32
      $region31: #{tpu_custom_call.1} parent=5 // pred_region
        %s193 = ssub.s32 %s16, 1
        %s194 = sand.u32 %s43, 1
        %s195 = scalar_lea.sflag [#allocation3], %s194
        %s196 = sand.u32 %s43, 1
        %s197 = smul.addr %s196, 64
        %s198 = scalar_lea.vmem [#allocation2], %s197
        // Predicated region
        $region33: #{tpu_custom_call.1} parent=31 // pred_check
          %p199 = pneg %p56
        $region34: #{tpu_custom_call.1} parent=31 // pred_check_branch
          %201 = sbr.rel (%p199) target = $region36
        $region35: #{tpu_custom_call.1} parent=31 // pred_region
          %203 = dma.done %s195, 1024
        $region36: #{tpu_custom_call.1} parent=31 // pred_fallthru
          _
        // Predicated region
        $region37: #{tpu_custom_call.1} parent=31 // pred_check
          %p204 = pneg %p77
        $region38: #{tpu_custom_call.1} parent=31 // pred_check_branch
          %206 = sbr.rel (%p204) target = $region40
        $region39: #{tpu_custom_call.1} parent=31 // pred_region
          %208 = dma.done [#allocation6], 256
        $region40: #{tpu_custom_call.1} parent=31 // pred_fallthru
          _
        %s209 = sand.u32 %s43, 1
        %s210 = scalar_lea.sflag [#allocation3], %s209
        %s211 = sand.u32 %s43, 1
        %s212 = smul.addr %s211, 64
        %s213 = scalar_lea.vmem [#allocation2], %s212
        %p214 = pneg %p56
        %p215 = pneg %p53
        %p216 = pneg %p77
        %p217 = pneg %p74
        %p218 = pneg %p98
        %p219 = pneg %p95
        %p220 = pneg %p126
        %p221 = pneg %p123
        %s222 = sand.u32 %s113, 1
        %s223 = scalar_lea.sflag [#allocation4], %s222
        %s224 = sand.u32 %s113, 1
        %s225 = smul.addr %s224, 64
        %s226 = scalar_lea.vmem [#allocation7], %s225
        %s227 = smul.u32 8, %s26
        %s228 = smul.u32 8, %s26
        %v230 = vld [vmem:[%s198] sm:$0xf]
        %v231 = vld [vmem:[%s198 + $0x4] sm:$0xf]
        %v232 = vld [vmem:[%s198 + $0x8] sm:$0xf]
        %v233 = vld [vmem:[%s198 + $0xc] sm:$0xf]
        %v234 = vld [vmem:[%s198 + $0x10] sm:$0xf]
        %v235 = vld [vmem:[%s198 + $0x14] sm:$0xf]
        %v236 = vld [vmem:[%s198 + $0x18] sm:$0xf]
        %v237 = vld [vmem:[%s198 + $0x1c] sm:$0xf]
        %v238 = vld [vmem:[%s198 + $0x20] sm:$0xf]
        %v239 = vld [vmem:[%s198 + $0x24] sm:$0xf]
        %v240 = vld [vmem:[%s198 + $0x28] sm:$0xf]
        %v241 = vld [vmem:[%s198 + $0x2c] sm:$0xf]
        %v242 = vld [vmem:[%s198 + $0x30] sm:$0xf]
        %v243 = vld [vmem:[%s198 + $0x34] sm:$0xf]
        %v244 = vld [vmem:[%s198 + $0x38] sm:$0xf]
        %v245 = vld [vmem:[%s198 + $0x3c] sm:$0xf]
        %v246 = vld [vmem:[#allocation5] sm:$0xf]
        %v247 = vld [vmem:[#allocation5 + $0x4] sm:$0xf]
        %v248 = vld [vmem:[#allocation5 + $0x8] sm:$0xf]
        %v249 = vld [vmem:[#allocation5 + $0xc] sm:$0x3]
        %v250 = vld [vmem:[%s2] sm:$0x1]
        %v252 = vperm.slane %v250, 0
        %v270 = vunpack.c.l.b16 %v230
        %v271 = vunpack.c.l.b16 %v231
        %v272 = vunpack.c.l.b16 %v232
        %v273 = vunpack.c.l.b16 %v233
        %v274 = vunpack.c.l.b16 %v234
        %v275 = vunpack.c.l.b16 %v235
        %v276 = vunpack.c.l.b16 %v236
        %v277 = vunpack.c.l.b16 %v237
        %v278 = vunpack.c.l.b16 %v238
        %v279 = vunpack.c.l.b16 %v239
        %v280 = vunpack.c.l.b16 %v240
        %v281 = vunpack.c.l.b16 %v241
        %v282 = vunpack.c.l.b16 %v242
        %v283 = vunpack.c.l.b16 %v243
        %v284 = vunpack.c.l.b16 %v244
        %v285 = vunpack.c.l.b16 %v245
        %v286 = vpack.c.b16 %v271, %v270
        %v287 = vpack.c.b16 %v273, %v272
        %v288 = vpack.c.b16 %v275, %v274
        %v289 = vpack.c.b16 %v277, %v276
        %v290 = vpack.c.b16 %v279, %v278
        %v291 = vpack.c.b16 %v281, %v280
        %v292 = vpack.c.b16 %v283, %v282
        %v293 = vpack.c.b16 %v285, %v284
        %v298 = vunpack.c.l.b16 %v246
        %v299 = vunpack.c.l.b16 %v247
        %v300 = vunpack.c.l.b16 %v248
        %v301 = vunpack.c.l.b16 %v249
        %v302 = vpack.c.b16 %v299, %v298
        %v303 = vpack.c.b16 %v301, %v300
        %vm305 = vcmask 220160
        %v307 = vsel %vm305, %v286, 0
        %v310 = vsel %vm305, %v287, 0
        %v313 = vsel %vm305, %v288, 0
        %v316 = vsel %vm305, %v289, 0
        %v319 = vsel %vm305, %v290, 0
        %v322 = vsel %vm305, %v291, 0
        %v325 = vsel %vm305, %v292, 0
        %v328 = vsel %vm305, %v293, 0
        %vm330 = vcmask 1044480
        %vm331 = vcmask 1045504
        %v332 = vsel %vm330, 4294967295, 65535
        %v333 = vsel %vm331, %v332, 0
        %v335 = vand.u32 %v303, %v333
        %337 = vmatpush.bf16.msra.mxu0 0
        %338 = vmatpush.bf16.msra.mxu0 0
        %339 = vmatpush.bf16.msra.mxu0 0
        %340 = vmatpush.bf16.msra.mxu0 0
        %341 = vmatpush.bf16.msra.mxu0 0
        %342 = vmatpush.bf16.msra.mxu0 0
        %343 = vmatpush.bf16.msra.mxu0 %v335
        %344 = vmatpush.bf16.msra.mxu0 %v302
        %345 = vmatmul.bf16.gmra.mxu0 %v307
        %v346 = vpop.f32.mrf.mxu0
        %v347 = vadd.f32 %v252, %v346
        %v348 = vpop.f32.mrf.mxu0
        %v349 = vadd.f32 %v252, %v348
        %350 = vmatmul.bf16.gmra.mxu0 %v310
        %v351 = vpop.f32.mrf.mxu0
        %v352 = vadd.f32 %v252, %v351
        %v353 = vpop.f32.mrf.mxu0
        %v354 = vadd.f32 %v252, %v353
        %355 = vmatmul.bf16.gmra.mxu0 %v313
        %v356 = vpop.f32.mrf.mxu0
        %v357 = vadd.f32 %v252, %v356
        %v358 = vpop.f32.mrf.mxu0
        %v359 = vadd.f32 %v252, %v358
        %360 = vmatmul.bf16.gmra.mxu0 %v316
        %v361 = vpop.f32.mrf.mxu0
        %v362 = vadd.f32 %v252, %v361
        %v363 = vpop.f32.mrf.mxu0
        %v364 = vadd.f32 %v252, %v363
        %365 = vmatmul.bf16.gmra.mxu0 %v319
        %v366 = vpop.f32.mrf.mxu0
        %v367 = vadd.f32 %v252, %v366
        %v368 = vpop.f32.mrf.mxu0
        %v369 = vadd.f32 %v252, %v368
        %370 = vmatmul.bf16.gmra.mxu0 %v322
        %v371 = vpop.f32.mrf.mxu0
        %v372 = vadd.f32 %v252, %v371
        %v373 = vpop.f32.mrf.mxu0
        %v374 = vadd.f32 %v252, %v373
        %375 = vmatmul.bf16.gmra.mxu0 %v325
        %v376 = vpop.f32.mrf.mxu0
        %v377 = vadd.f32 %v252, %v376
        %v378 = vpop.f32.mrf.mxu0
        %v379 = vadd.f32 %v252, %v378
        %380 = vmatmul.bf16.gmra.mxu0 %v328
        %v381 = vpop.f32.mrf.mxu0
        %v382 = vadd.f32 %v252, %v381
        %v383 = vpop.f32.mrf.mxu0
        %v384 = vadd.f32 %v252, %v383
        %385 = vdwg.mxu0
        %v386 = vmax.f32 %v347, 0.0
        %v387 = vmax.f32 %v349, 0.0
        %v388 = vmax.f32 %v352, 0.0
        %v389 = vmax.f32 %v354, 0.0
        %v390 = vmax.f32 %v357, 0.0
        %v391 = vmax.f32 %v359, 0.0
        %v392 = vmax.f32 %v362, 0.0
        %v393 = vmax.f32 %v364, 0.0
        %v394 = vmax.f32 %v367, 0.0
        %v395 = vmax.f32 %v369, 0.0
        %v396 = vmax.f32 %v372, 0.0
        %v397 = vmax.f32 %v374, 0.0
        %v398 = vmax.f32 %v377, 0.0
        %v399 = vmax.f32 %v379, 0.0
        %v400 = vmax.f32 %v382, 0.0
        %v401 = vmax.f32 %v384, 0.0
        %v402 = vpack.c.bf16 %v386, %v386
        %v403 = vpack.c.bf16 %v387, %v387
        %v404 = vpack.c.bf16 %v388, %v388
        %v405 = vpack.c.bf16 %v389, %v389
        %v406 = vpack.c.bf16 %v390, %v390
        %v407 = vpack.c.bf16 %v391, %v391
        %v408 = vpack.c.bf16 %v392, %v392
        %v409 = vpack.c.bf16 %v393, %v393
        %v410 = vpack.c.bf16 %v394, %v394
        %v411 = vpack.c.bf16 %v395, %v395
        %v412 = vpack.c.bf16 %v396, %v396
        %v413 = vpack.c.bf16 %v397, %v397
        %v414 = vpack.c.bf16 %v398, %v398
        %v415 = vpack.c.bf16 %v399, %v399
        %v416 = vpack.c.bf16 %v400, %v400
        %v417 = vpack.c.bf16 %v401, %v401
        %vm418 = vcmask 519168
        %419 = vst.msk [vmem:[%s226] sm:$0xf] %vm418, %v402
        %420 = vst.msk [vmem:[%s226 + $0x4] sm:$0xf] %vm418, %v403
        %421 = vst.msk [vmem:[%s226 + $0x8] sm:$0xf] %vm418, %v404
        %422 = vst.msk [vmem:[%s226 + $0xc] sm:$0xf] %vm418, %v405
        %423 = vst.msk [vmem:[%s226 + $0x10] sm:$0xf] %vm418, %v406
        %424 = vst.msk [vmem:[%s226 + $0x14] sm:$0xf] %vm418, %v407
        %425 = vst.msk [vmem:[%s226 + $0x18] sm:$0xf] %vm418, %v408
        %426 = vst.msk [vmem:[%s226 + $0x1c] sm:$0xf] %vm418, %v409
        %427 = vst.msk [vmem:[%s226 + $0x20] sm:$0xf] %vm418, %v410
        %428 = vst.msk [vmem:[%s226 + $0x24] sm:$0xf] %vm418, %v411
        %429 = vst.msk [vmem:[%s226 + $0x28] sm:$0xf] %vm418, %v412
        %430 = vst.msk [vmem:[%s226 + $0x2c] sm:$0xf] %vm418, %v413
        %431 = vst.msk [vmem:[%s226 + $0x30] sm:$0xf] %vm418, %v414
        %432 = vst.msk [vmem:[%s226 + $0x34] sm:$0xf] %vm418, %v415
        %433 = vst.msk [vmem:[%s226 + $0x38] sm:$0xf] %vm418, %v416
        %434 = vst.msk [vmem:[%s226 + $0x3c] sm:$0xf] %vm418, %v417
        %s435 = sand.u32 %s113, 1
        %s436 = scalar_lea.sflag [#allocation4], %s435
        %s437 = sand.u32 %s113, 1
        %s438 = smul.addr %s437, 64
        %s439 = scalar_lea.vmem [#allocation7], %s438
        // Predicated region
        $region41: #{tpu_custom_call.1} parent=31 // pred_check
          %p440 = pneg %p123
        $region42: #{tpu_custom_call.1} parent=31 // pred_check_branch
          %442 = sbr.rel (%p440) target = $region44
        $region43: #{tpu_custom_call.1} parent=31 // pred_region
          %s443 = smul.u32 8, %s26
          %445 = vsyncadd %s436, 0
          %s446 = smul.addr %s443, 2
          %s447 = smul.addr %s25, 32
          %s448 = sadd.s32 %s446, %s447
          %s449 = smul.addr %s448, 4
          %s450 = scalar_lea.hbm %s3, %s449
          %s451 = sshll.u32 %s439, 4
          %s452 = int_to_ptr.vmem [resolvable:$true] %s451
          %s453 = sshll.u32 %s450, 4
          %s454 = int_to_ptr.hbm [resolvable:$true] %s453
          %459 = dma.vmem_to_hbm [thread:$0]  %s452, 1024, %s454, %s436, 64, 64, 4
        $region44: #{tpu_custom_call.1} parent=31 // pred_fallthru
          _
      $region32: #{tpu_custom_call.1} parent=5 // pred_fallthru
        _
      %p460 = scmp.le.s32.totalorder 2, %s16
      // Predicated region
      $region45: #{tpu_custom_call.1} parent=5 // pred_check
        %p461 = pneg %p460
      $region46: #{tpu_custom_call.1} parent=5 // pred_check_branch
        %463 = sbr.rel (%p461) target = $region48
      $region47: #{tpu_custom_call.1} parent=5 // pred_region
        %s464 = ssub.s32 %s16, 2
        // Predicated region
        $region49: #{tpu_custom_call.1} parent=47 // pred_check
          %p465 = pneg %p129
        $region50: #{tpu_custom_call.1} parent=47 // pred_check_branch
          %467 = sbr.rel (%p465) target = $region52
        $region51: #{tpu_custom_call.1} parent=47 // pred_region
          %s468 = sand.u32 %s114, 1
          %s469 = scalar_lea.sflag [#allocation4], %s468
          %s470 = sand.u32 %s114, 1
          %s471 = smul.addr %s470, 64
          %s472 = scalar_lea.vmem [#allocation7], %s471
          %474 = dma.done %s469, 1024
        $region52: #{tpu_custom_call.1} parent=47 // pred_fallthru
          _
      $region48: #{tpu_custom_call.1} parent=5 // pred_fallthru
        _
    $region6: #{tpu_custom_call.1} parent=1 // loop_footer
      %s20 = sadd.s32 1, %s16
    $region7: #{tpu_custom_call.1} parent=1 // loop_footer_branch
      %15 = sbr.rel target = $region3
    $region8: #{tpu_custom_call.1} parent=1 // loop_exit
      _
    %475 = vsyncpa [#allocation3], 1
    %s476 = scalar_lea.sflag [#allocation3], 1
    %477 = vsyncpa %s476, 1
    %478 = vsyncpa [#allocation6], 1
    %479 = vsyncpa [#allocation4], 1
    %s480 = scalar_lea.sflag [#allocation4], 1
    %481 = vsyncpa %s480, 1

</llo_original>
